<compile_context>
chip_gen: v7x
topology: tpu7x:2x2x1
jax: 0.10.0
libtpu: 0.0.40
codegen_flags: <defaults>
</compile_context>

<pallas_src>
import functools

import jax
import jax.numpy as jnp
from jax.experimental import pallas as pl
from jax.experimental.pallas import tpu as pltpu


def _round_up(x, m):
    return ((x + m - 1) // m) * m


def mlp_kernel(x_ref, w1_ref, w2_ref, w3_ref, b_ref, o_ref, *, h1p, h2p, cp):
    # x_ref: (TB, Kp) bf16; w*_ref: padded bf16 weights; b_ref: (1, h1p+h2p+cp) f32.
    b1 = b_ref[:, 0:h1p]                       # static slices: free
    b2 = b_ref[:, h1p:h1p + h2p]
    b3 = b_ref[:, h1p + h2p:h1p + h2p + cp]

    # fc1 + relu (bf16 in, f32 accumulate)
    h1 = jnp.dot(x_ref[...], w1_ref[...], preferred_element_type=jnp.float32) + b1
    h1 = jnp.maximum(h1, 0.0)

    # fc2 + relu
    h2 = jnp.dot(h1.astype(w2_ref.dtype), w2_ref[...],
                 preferred_element_type=jnp.float32) + b2
    h2 = jnp.maximum(h2, 0.0)

    # fc3 (no activation); lane-dense (TB, Cp) store
    out = jnp.dot(h2.astype(w3_ref.dtype), w3_ref[...],
                  preferred_element_type=jnp.float32) + b3
    o_ref[...] = out.astype(o_ref.dtype)


def two_layer_net(x, w1, b1, w2, b2, w3, b3, *,
                  block_batch=256, compute_dtype=jnp.bfloat16):
    """x: (B, K) f32; weights stored (in, out) = transpose of nn.Linear layout."""
    B, K = x.shape
    H1, H2, C = w1.shape[1], w2.shape[1], w3.shape[1]

    # Lane-pad all feature dims to multiples of 128 (natural MXU/vreg tile).
    Kp, H1p, H2p, Cp = (_round_up(d, 128) for d in (K, H1, H2, C))

    # Batch tile: keep modest so the double-buffered (TB,Kp) bf16 input tile and
    # (TB,Cp) f32 output tile stay far below even v7x's 32 MiB scoped VMEM.
    TB = min(block_batch, _round_up(B, 8))
    Bp = _round_up(B, TB)

    def pad2(a, r, c):
        return jnp.pad(a, ((0, r - a.shape[0]), (0, c - a.shape[1])))

    xp = pad2(x, Bp, Kp).astype(compute_dtype)
    w1p = pad2(w1, Kp, H1p).astype(compute_dtype)
    w2p = pad2(w2, H1p, H2p).astype(compute_dtype)
    w3p = pad2(w3, H2p, Cp).astype(compute_dtype)
    # Fuse the three biases into one aligned f32 buffer -> single DMA.
    bcat = jnp.concatenate(
        [pad2(b1.reshape(1, -1), 1, H1p),
         pad2(b2.reshape(1, -1), 1, H2p),
         pad2(b3.reshape(1, -1), 1, Cp)], axis=1).astype(jnp.float32)

    grid = (Bp // TB,)

    itemsize = jnp.dtype(compute_dtype).itemsize
    flops = 2 * Bp * (Kp * H1p + H1p * H2p + H2p * Cp)
    bytes_accessed = (xp.size * itemsize
                      + (w1p.size + w2p.size + w3p.size) * itemsize
                      + bcat.size * 4
                      + Bp * Cp * 4)

    kernel = functools.partial(mlp_kernel, h1p=H1p, h2p=H2p, cp=Cp)

    out_padded = pl.pallas_call(
        kernel,
        out_shape=jax.ShapeDtypeStruct((Bp, Cp), jnp.float32),
        grid_spec=pltpu.PrefetchScalarGridSpec(
            num_scalar_prefetch=0,
            grid=grid,
            in_specs=[
                pl.BlockSpec((TB, Kp), lambda i: (i, 0)),       # activations: tiled over batch
                pl.BlockSpec((Kp, H1p), lambda i: (0, 0)),      # weights: VMEM-resident
                pl.BlockSpec((H1p, H2p), lambda i: (0, 0)),
                pl.BlockSpec((H2p, Cp), lambda i: (0, 0)),
                pl.BlockSpec((1, H1p + H2p + Cp), lambda i: (0, 0)),  # fused biases
            ],
            out_specs=pl.BlockSpec((TB, Cp), lambda i: (i, 0)),
        ),
        compiler_params=pltpu.CompilerParams(
            dimension_semantics=("parallel",),   # batch-parallel -> both TCs on v7x
        ),
        cost_estimate=pl.CostEstimate(
            flops=flops, transcendentals=0, bytes_accessed=bytes_accessed),
    )(xp, w1p, w2p, w3p, bcat)

    # Slice padded batch/classes back to the logical shape.
    return out_padded[:B, :C]


def init_linear(key, fan_in, fan_out, dtype=jnp.float32):
    # Mirrors nn.Linear's U(-1/sqrt(fan_in), 1/sqrt(fan_in)); stored as (in, out).
    kw, kb = jax.random.split(key)
    bound = 1.0 / (fan_in ** 0.5)
    w = jax.random.uniform(kw, (fan_in, fan_out), dtype, minval=-bound, maxval=bound)
    b = jax.random.uniform(kb, (1, fan_out), dtype, minval=-bound, maxval=bound)
    return w, b


if __name__ == "__main__":
    input_size = 200
    hidden_size_1 = 64
    hidden_size_2 = 32
    num_classes = 7
    batch = 8

    key = jax.random.PRNGKey(0)
    kx, k1, k2, k3 = jax.random.split(key, 4)

    x = jax.random.normal(kx, (batch, input_size), jnp.float32)
    w1, b1 = init_linear(k1, input_size, hidden_size_1)
    w2, b2 = init_linear(k2, hidden_size_1, hidden_size_2)
    w3, b3 = init_linear(k3, hidden_size_2, num_classes)

    out = two_layer_net(x, w1, b1, w2, b2, w3, b3)
    out = jax.block_until_ready(out)
    assert out.shape == (batch, num_classes)

    # Reference with the same bf16-in / f32-accumulate recipe as the kernel.
    xb, w1b = x.astype(jnp.bfloat16), w1.astype(jnp.bfloat16)
    w2b, w3b = w2.astype(jnp.bfloat16), w3.astype(jnp.bfloat16)
    ref = jnp.maximum(jnp.dot(xb, w1b, preferred_element_type=jnp.float32) + b1, 0.0)
    ref = jnp.maximum(jnp.dot(ref.astype(jnp.bfloat16), w2b,
                              preferred_element_type=jnp.float32) + b2, 0.0)
    ref = jnp.dot(ref.astype(jnp.bfloat16), w3b,
                  preferred_element_type=jnp.float32) + b3
    assert jnp.allclose(out, ref, atol=2e-3, rtol=2e-3)

    # Looser sanity check against the full-f32 model (bf16 rounding error only).
    ref32 = jnp.maximum(x @ w1 + b1, 0.0)
    ref32 = jnp.maximum(ref32 @ w2 + b2, 0.0)
    ref32 = ref32 @ w3 + b3
    assert jnp.allclose(out, ref32, atol=5e-2, rtol=5e-2)

    print("KERNEL_OK")
</pallas_src>

<mosaic_0001>
module attributes {stable_mosaic.version = 11 : i64} {
  func.func @mlp_kernel(%arg0: i32, %arg1: memref<8x256xbf16, #tpu.memory_space<vmem>>, %arg2: memref<256x128xbf16, #tpu.memory_space<vmem>>, %arg3: memref<128x128xbf16, #tpu.memory_space<vmem>>, %arg4: memref<128x128xbf16, #tpu.memory_space<vmem>>, %arg5: memref<1x384xf32, #tpu.memory_space<vmem>>, %arg6: memref<8x128xf32, #tpu.memory_space<vmem>>) attributes {dimension_semantics = [#tpu.dimension_semantics<parallel>], iteration_bounds = array<i64: 1>, scalar_prefetch = 0 : i64, scratch_operands = 0 : i64, tpu.core_type = #tpu.core_type<tc>, window_params = [{transform_indices = @transform_0, window_bounds = array<i64: 8, 256>}, {pipeline_mode = #tpu.pipeline_mode<synchronous>, transform_indices = @transform_1, window_bounds = array<i64: 256, 128>}, {pipeline_mode = #tpu.pipeline_mode<synchronous>, transform_indices = @transform_2, window_bounds = array<i64: 128, 128>}, {pipeline_mode = #tpu.pipeline_mode<synchronous>, transform_indices = @transform_3, window_bounds = array<i64: 128, 128>}, {pipeline_mode = #tpu.pipeline_mode<synchronous>, transform_indices = @transform_4, window_bounds = array<i64: 1, 384>}, {transform_indices = @transform_5, window_bounds = array<i64: 8, 128>}]} {
    %c0 = arith.constant 0 : index
    %c0_0 = arith.constant 0 : index
    %0 = vector.load %arg5[%c0, %c0_0] : memref<1x384xf32, #tpu.memory_space<vmem>>, vector<1x128xf32>
    %c0_1 = arith.constant 0 : index
    %c128 = arith.constant 128 : index
    %1 = vector.load %arg5[%c0_1, %c128] : memref<1x384xf32, #tpu.memory_space<vmem>>, vector<1x128xf32>
    %c0_2 = arith.constant 0 : index
    %c256 = arith.constant 256 : index
    %2 = vector.load %arg5[%c0_2, %c256] : memref<1x384xf32, #tpu.memory_space<vmem>>, vector<1x128xf32>
    %c0_3 = arith.constant 0 : index
    %c0_4 = arith.constant 0 : index
    %3 = vector.load %arg1[%c0_3, %c0_4] : memref<8x256xbf16, #tpu.memory_space<vmem>>, vector<8x256xbf16>
    %c0_5 = arith.constant 0 : index
    %c0_6 = arith.constant 0 : index
    %4 = vector.load %arg2[%c0_5, %c0_6] : memref<256x128xbf16, #tpu.memory_space<vmem>>, vector<256x128xbf16>
    %cst = arith.constant dense<0.000000e+00> : vector<8x128xf32>
    %5 = tpu.matmul %3, %4, %cst {dimension_numbers = #tpu.dot_dimension_numbers<[1], [0], [0], [1], [0, 0, 1, 1], [], []>} : vector<8x256xbf16>, vector<256x128xbf16>, vector<8x128xf32> -> vector<8x128xf32>
    %6 = vector.broadcast %0 : vector<1x128xf32> to vector<8x128xf32>
    %7 = arith.addf %5, %6 : vector<8x128xf32>
    %cst_7 = arith.constant 0.000000e+00 : f32
    %8 = vector.broadcast %cst_7 : f32 to vector<8x128xf32>
    %9 = arith.maximumf %7, %8 : vector<8x128xf32>
    %10 = arith.truncf %9 : vector<8x128xf32> to vector<8x128xbf16>
    %c0_8 = arith.constant 0 : index
    %c0_9 = arith.constant 0 : index
    %11 = vector.load %arg3[%c0_8, %c0_9] : memref<128x128xbf16, #tpu.memory_space<vmem>>, vector<128x128xbf16>
    %cst_10 = arith.constant dense<0.000000e+00> : vector<8x128xf32>
    %12 = tpu.matmul %10, %11, %cst_10 {dimension_numbers = #tpu.dot_dimension_numbers<[1], [0], [0], [1], [0, 0, 1, 1], [], []>} : vector<8x128xbf16>, vector<128x128xbf16>, vector<8x128xf32> -> vector<8x128xf32>
    %13 = vector.broadcast %1 : vector<1x128xf32> to vector<8x128xf32>
    %14 = arith.addf %12, %13 : vector<8x128xf32>
    %cst_11 = arith.constant 0.000000e+00 : f32
    %15 = vector.broadcast %cst_11 : f32 to vector<8x128xf32>
    %16 = arith.maximumf %14, %15 : vector<8x128xf32>
    %17 = arith.truncf %16 : vector<8x128xf32> to vector<8x128xbf16>
    %c0_12 = arith.constant 0 : index
    %c0_13 = arith.constant 0 : index
    %18 = vector.load %arg4[%c0_12, %c0_13] : memref<128x128xbf16, #tpu.memory_space<vmem>>, vector<128x128xbf16>
    %cst_14 = arith.constant dense<0.000000e+00> : vector<8x128xf32>
    %19 = tpu.matmul %17, %18, %cst_14 {dimension_numbers = #tpu.dot_dimension_numbers<[1], [0], [0], [1], [0, 0, 1, 1], [], []>} : vector<8x128xbf16>, vector<128x128xbf16>, vector<8x128xf32> -> vector<8x128xf32>
    %20 = vector.broadcast %2 : vector<1x128xf32> to vector<8x128xf32>
    %21 = arith.addf %19, %20 : vector<8x128xf32>
    %c0_15 = arith.constant 0 : index
    %c0_16 = arith.constant 0 : index
    %22 = vector.load %arg6[%c0_15, %c0_16] : memref<8x128xf32, #tpu.memory_space<vmem>>, vector<8x128xf32>
    tpu.vector_store %arg6[%c0_15, %c0_16], %21 {strides = array<i32>} : memref<8x128xf32, #tpu.memory_space<vmem>>, vector<8x128xf32>,
    return
  }
  func.func @transform_0(%arg0: i32) -> (i32, i32) {
    %c0_i32 = arith.constant 0 : i32
    %c0_i32_0 = arith.constant 0 : i32
    return %arg0, %c0_i32 : i32, i32
  }
  func.func @transform_1(%arg0: i32) -> (i32, i32) {
    %c0_i32 = arith.constant 0 : i32
    %c0_i32_0 = arith.constant 0 : i32
    %c0_i32_1 = arith.constant 0 : i32
    return %c0_i32, %c0_i32_0 : i32, i32
  }
  func.func @transform_2(%arg0: i32) -> (i32, i32) {
    %c0_i32 = arith.constant 0 : i32
    %c0_i32_0 = arith.constant 0 : i32
    %c0_i32_1 = arith.constant 0 : i32
    return %c0_i32, %c0_i32_0 : i32, i32
  }
  func.func @transform_3(%arg0: i32) -> (i32, i32) {
    %c0_i32 = arith.constant 0 : i32
    %c0_i32_0 = arith.constant 0 : i32
    %c0_i32_1 = arith.constant 0 : i32
    return %c0_i32, %c0_i32_0 : i32, i32
  }
  func.func @transform_4(%arg0: i32) -> (i32, i32) {
    %c0_i32 = arith.constant 0 : i32
    %c0_i32_0 = arith.constant 0 : i32
    %c0_i32_1 = arith.constant 0 : i32
    return %c0_i32, %c0_i32_0 : i32, i32
  }
  func.func @transform_5(%arg0: i32) -> (i32, i32) {
    %c0_i32 = arith.constant 0 : i32
    %c0_i32_0 = arith.constant 0 : i32
    return %arg0, %c0_i32 : i32, i32
  }
}

</mosaic_0001>

<llo_original>
// kernel: tpu_custom_call.1
$region0: #{tpu_custom_call.1}
  #allocation0 [shape = 'u32[]', space=smem, size = 0x4, offset = 0x4, fixed_abs, tag = 'smem constant byte address 0x4 - core index']
  #allocation1 [shape = 'u32[144,128]{1,0:T(1,128)}', space=vmem, size = 0x12000, scoped, tag = 'internal scratch']
  %s0 = inlined_call_operand.hbm [shape: bf16[8,256], index: 0, kind: input, shape index: {}]
  %s1 = inlined_call_operand.hbm [shape: bf16[256,128], index: 1, kind: input, shape index: {}]
  %s2 = inlined_call_operand.hbm [shape: bf16[128,128], index: 2, kind: input, shape index: {}]
  %s3 = inlined_call_operand.hbm [shape: bf16[128,128], index: 3, kind: input, shape index: {}]
  %s4 = inlined_call_operand.vmem [shape: f32[1,384], index: 4, kind: input, shape index: {}]
  %s5 = inlined_call_operand.hbm [shape: f32[8,128], index: 5, kind: output, shape index: {}]
  %s6 = sld [smem:[#allocation0]]
  $region46: #{tpu_custom_call.1} parent=0
    _
  %s8 = ssub.s32 1, %s6
  %s9 = scalar_select 0, %s8, %s6
  $region1: #{tpu_custom_call.1} parent=0
    #allocation2 [shape = 'u8[4096]{0}', space=vmem, size = 0x1000, scoped, tag = 'input window, operand 0, single buffered']
    #allocation3 [shape = 's32[1]{0}', space=sflag, size = 0x4, scoped, tag = 'scoped memory for tpu_custom_call.1']
    #allocation4 [shape = 's32[1]{0}', space=sflag, size = 0x4, scoped, tag = 'scoped memory for tpu_custom_call.1']
    #allocation5 [shape = 'u8[65536]{0}', space=vmem, size = 0x10000, scoped, tag = 'input window, operand 1, single buffered']
    #allocation6 [shape = 's32[1]{0}', space=sflag, size = 0x4, scoped, tag = 'scoped memory for tpu_custom_call.1']
    #allocation7 [shape = 'u8[32768]{0}', space=vmem, size = 0x8000, scoped, tag = 'input window, operand 2, single buffered']
    #allocation8 [shape = 'u8[32768]{0}', space=vmem, size = 0x8000, scoped, tag = 'input window, operand 3, single buffered']
    #allocation9 [shape = 's32[1]{0}', space=sflag, size = 0x4, scoped, tag = 'scoped memory for tpu_custom_call.1']
    #allocation10 [shape = 'u8[4096]{0}', space=vmem, size = 0x1000, scoped, tag = 'output window, operand 0, single buffered']
    %10 = vsyncpa [#allocation3], 0
    %11 = vsyncpa [#allocation6], 0
    %12 = vsyncpa [#allocation9], 0
    %13 = vsyncpa [#allocation4], 0
    // Predicated region
    $region2: #{tpu_custom_call.1} parent=1 // pred_check
      _
    $region3: #{tpu_custom_call.1} parent=1 // pred_check_branch
      %15 = sbr.rel (0) target = $region5
    $region4: #{tpu_custom_call.1} parent=1 // pred_region
      %s17 = ssub.s32 128, 128
      %18 = vsyncadd [#allocation3], %s17
      %s20 = sshll.u32 [#allocation2], 4
      %s21 = int_to_ptr.vmem [resolvable:$true] %s20
      %23 = dma.hbm_to_vmem [thread:$0]  %s0, 128, %s21, [#allocation3]
    $region5: #{tpu_custom_call.1} parent=1 // pred_fallthru
      _
    // Predicated region
    $region6: #{tpu_custom_call.1} parent=1 // pred_check
      _
    $region7: #{tpu_custom_call.1} parent=1 // pred_check_branch
      %25 = sbr.rel (0) target = $region9
    $region8: #{tpu_custom_call.1} parent=1 // pred_region
      %s27 = ssub.s32 2048, 2048
      %28 = vsyncadd [#allocation6], %s27
      %s29 = sshll.u32 [#allocation5], 4
      %s30 = int_to_ptr.vmem [resolvable:$true] %s29
      %35 = dma.hbm_to_vmem [thread:$0]  %s1, 2048, %s30, [#allocation6], 64, 64, 4
    $region9: #{tpu_custom_call.1} parent=1 // pred_fallthru
      _
    // Predicated region
    $region10: #{tpu_custom_call.1} parent=1 // pred_check
      _
    $region11: #{tpu_custom_call.1} parent=1 // pred_check_branch
      %37 = sbr.rel (0) target = $region13
    $region12: #{tpu_custom_call.1} parent=1 // pred_region
      %s39 = ssub.s32 1024, 1024
      %40 = vsyncadd [#allocation6], %s39
      %s41 = sshll.u32 [#allocation7], 4
      %s42 = int_to_ptr.vmem [resolvable:$true] %s41
      %47 = dma.hbm_to_vmem [thread:$0]  %s2, 1024, %s42, [#allocation6], 64, 64, 4
    $region13: #{tpu_custom_call.1} parent=1 // pred_fallthru
      _
    // Predicated region
    $region14: #{tpu_custom_call.1} parent=1 // pred_check
      _
    $region15: #{tpu_custom_call.1} parent=1 // pred_check_branch
      %49 = sbr.rel (0) target = $region17
    $region16: #{tpu_custom_call.1} parent=1 // pred_region
      %s51 = ssub.s32 1024, 1024
      %52 = vsyncadd [#allocation9], %s51
      %s53 = sshll.u32 [#allocation8], 4
      %s54 = int_to_ptr.vmem [resolvable:$true] %s53
      %59 = dma.hbm_to_vmem [thread:$0]  %s3, 1024, %s54, [#allocation9], 64, 64, 4
    $region17: #{tpu_custom_call.1} parent=1 // pred_fallthru
      _
    // Predicated region
    $region18: #{tpu_custom_call.1} parent=1 // pred_check
      _
    $region19: #{tpu_custom_call.1} parent=1 // pred_check_branch
      %61 = sbr.rel (0) target = $region21
    $region20: #{tpu_custom_call.1} parent=1 // pred_region
      _
    $region21: #{tpu_custom_call.1} parent=1 // pred_fallthru
      _
    // Predicated region
    $region22: #{tpu_custom_call.1} parent=1 // pred_check
      _
    $region23: #{tpu_custom_call.1} parent=1 // pred_check_branch
      %63 = sbr.rel (0) target = $region25
    $region24: #{tpu_custom_call.1} parent=1 // pred_region
      %64 = dma.done [#allocation3], 128
    $region25: #{tpu_custom_call.1} parent=1 // pred_fallthru
      _
    // Predicated region
    $region26: #{tpu_custom_call.1} parent=1 // pred_check
      _
    $region27: #{tpu_custom_call.1} parent=1 // pred_check_branch
      %66 = sbr.rel (0) target = $region29
    $region28: #{tpu_custom_call.1} parent=1 // pred_region
      %67 = dma.done [#allocation6], 2048
    $region29: #{tpu_custom_call.1} parent=1 // pred_fallthru
      _
    // Predicated region
    $region30: #{tpu_custom_call.1} parent=1 // pred_check
      _
    $region31: #{tpu_custom_call.1} parent=1 // pred_check_branch
      %69 = sbr.rel (0) target = $region33
    $region32: #{tpu_custom_call.1} parent=1 // pred_region
      %70 = dma.done [#allocation6], 1024
    $region33: #{tpu_custom_call.1} parent=1 // pred_fallthru
      _
    // Predicated region
    $region34: #{tpu_custom_call.1} parent=1 // pred_check
      _
    $region35: #{tpu_custom_call.1} parent=1 // pred_check_branch
      %72 = sbr.rel (0) target = $region37
    $region36: #{tpu_custom_call.1} parent=1 // pred_region
      %73 = dma.done [#allocation9], 1024
    $region37: #{tpu_custom_call.1} parent=1 // pred_fallthru
      _
    %v75 = vld [vmem:[%s4] sm:$0x1]
    %v76 = vld [vmem:[%s4 + $0x1] sm:$0x1]
    %v77 = vld [vmem:[%s4 + $0x2] sm:$0x1]
    %v78 = vld [vmem:[#allocation2] sm:$0xff]
    %v79 = vld [vmem:[#allocation5] sm:$0xf]
    %v80 = vld [vmem:[#allocation5 + $0x4] sm:$0xf]
    %v81 = vld [vmem:[#allocation5 + $0x8] sm:$0xf]
    %v82 = vld [vmem:[#allocation5 + $0xc] sm:$0xf]
    %v83 = vld [vmem:[#allocation5 + $0x10] sm:$0xf]
    %v84 = vld [vmem:[#allocation5 + $0x14] sm:$0xf]
    %v85 = vld [vmem:[#allocation5 + $0x18] sm:$0xf]
    %v86 = vld [vmem:[#allocation5 + $0x1c] sm:$0xf]
    %v87 = vld [vmem:[#allocation5 + $0x20] sm:$0xf]
    %v88 = vld [vmem:[#allocation5 + $0x24] sm:$0xf]
    %v89 = vld [vmem:[#allocation5 + $0x28] sm:$0xf]
    %v90 = vld [vmem:[#allocation5 + $0x2c] sm:$0xf]
    %v91 = vld [vmem:[#allocation5 + $0x30] sm:$0xf]
    %v92 = vld [vmem:[#allocation5 + $0x34] sm:$0xf]
    %v93 = vld [vmem:[#allocation5 + $0x38] sm:$0xf]
    %v94 = vld [vmem:[#allocation5 + $0x3c] sm:$0xf]
    %v95 = vld [vmem:[#allocation5 + $0x40] sm:$0xf]
    %v96 = vld [vmem:[#allocation5 + $0x44] sm:$0xf]
    %v97 = vld [vmem:[#allocation5 + $0x48] sm:$0xf]
    %v98 = vld [vmem:[#allocation5 + $0x4c] sm:$0xf]
    %v99 = vld [vmem:[#allocation5 + $0x50] sm:$0xf]
    %v100 = vld [vmem:[#allocation5 + $0x54] sm:$0xf]
    %v101 = vld [vmem:[#allocation5 + $0x58] sm:$0xf]
    %v102 = vld [vmem:[#allocation5 + $0x5c] sm:$0xf]
    %v103 = vld [vmem:[#allocation5 + $0x60] sm:$0xf]
    %v104 = vld [vmem:[#allocation5 + $0x64] sm:$0xf]
    %v105 = vld [vmem:[#allocation5 + $0x68] sm:$0xf]
    %v106 = vld [vmem:[#allocation5 + $0x6c] sm:$0xf]
    %v107 = vld [vmem:[#allocation5 + $0x70] sm:$0xf]
    %v108 = vld [vmem:[#allocation5 + $0x74] sm:$0xf]
    %v109 = vld [vmem:[#allocation5 + $0x78] sm:$0xf]
    %v110 = vld [vmem:[#allocation5 + $0x7c] sm:$0xf]
    %v112 = vlaneseq
    %v113 = vshrl.u32 %v112, 7
    %v114 = vsub.s32 0, %v113
    %v115 = vrot.slane %v75, %v114
    %v118 = vunpack.c.l.b16 %v78
    %v119 = vunpack.c.h.b16 %v78
    %v120 = vpack.c.b16 %v118, %v118
    %v121 = vpack.c.b16 %v119, %v119
    %v156 = vunpack.c.l.b16 %v79
    %v157 = vunpack.c.l.b16 %v80
    %v158 = vunpack.c.l.b16 %v81
    %v159 = vunpack.c.l.b16 %v82
    %v160 = vunpack.c.l.b16 %v83
    %v161 = vunpack.c.l.b16 %v84
    %v162 = vunpack.c.l.b16 %v85
    %v163 = vunpack.c.l.b16 %v86
    %v164 = vunpack.c.l.b16 %v87
    %v165 = vunpack.c.l.b16 %v88
    %v166 = vunpack.c.l.b16 %v89
    %v167 = vunpack.c.l.b16 %v90
    %v168 = vunpack.c.l.b16 %v91
    %v169 = vunpack.c.l.b16 %v92
    %v170 = vunpack.c.l.b16 %v93
    %v171 = vunpack.c.l.b16 %v94
    %v172 = vunpack.c.l.b16 %v95
    %v173 = vunpack.c.l.b16 %v96
    %v174 = vunpack.c.l.b16 %v97
    %v175 = vunpack.c.l.b16 %v98
    %v176 = vunpack.c.l.b16 %v99
    %v177 = vunpack.c.l.b16 %v100
    %v178 = vunpack.c.l.b16 %v101
    %v179 = vunpack.c.l.b16 %v102
    %v180 = vunpack.c.l.b16 %v103
    %v181 = vunpack.c.l.b16 %v104
    %v182 = vunpack.c.l.b16 %v105
    %v183 = vunpack.c.l.b16 %v106
    %v184 = vunpack.c.l.b16 %v107
    %v185 = vunpack.c.l.b16 %v108
    %v186 = vunpack.c.l.b16 %v109
    %v187 = vunpack.c.l.b16 %v110
    %v188 = vpack.c.b16 %v157, %v156
    %v189 = vpack.c.b16 %v159, %v158
    %v190 = vpack.c.b16 %v161, %v160
    %v191 = vpack.c.b16 %v163, %v162
    %v192 = vpack.c.b16 %v165, %v164
    %v193 = vpack.c.b16 %v167, %v166
    %v194 = vpack.c.b16 %v169, %v168
    %v195 = vpack.c.b16 %v171, %v170
    %v196 = vpack.c.b16 %v173, %v172
    %v197 = vpack.c.b16 %v175, %v174
    %v198 = vpack.c.b16 %v177, %v176
    %v199 = vpack.c.b16 %v179, %v178
    %v200 = vpack.c.b16 %v181, %v180
    %v201 = vpack.c.b16 %v183, %v182
    %v202 = vpack.c.b16 %v185, %v184
    %v203 = vpack.c.b16 %v187, %v186
    %220 = vmatprep.subr.bf16.mxu0 0
    %221 = vmatpush1.bf16.msra.mxu0 %v188
    %222 = vmatprep.subr.bf16.mxu0 0
    %223 = vmatpush1.bf16.msra.mxu0 %v189
    %224 = vmatprep.subr.bf16.mxu0 0
    %225 = vmatpush1.bf16.msra.mxu0 %v190
    %226 = vmatprep.subr.bf16.mxu0 0
    %227 = vmatpush1.bf16.msra.mxu0 %v191
    %228 = vmatprep.subr.bf16.mxu0 0
    %229 = vmatpush1.bf16.msra.mxu0 %v192
    %230 = vmatprep.subr.bf16.mxu0 0
    %231 = vmatpush1.bf16.msra.mxu0 %v193
    %232 = vmatprep.subr.bf16.mxu0 0
    %233 = vmatpush1.bf16.msra.mxu0 %v194
    %234 = vmatprep.subr.bf16.mxu0 0
    %235 = vmatpush1.bf16.msra.mxu0 %v195
    %236 = vmatprep.subr.bf16.mxu0 0
    %237 = vmatpush1.bf16.msra.mxu0 %v196
    %238 = vmatprep.subr.bf16.mxu0 0
    %239 = vmatpush1.bf16.msra.mxu0 %v197
    %240 = vmatprep.subr.bf16.mxu0 0
    %241 = vmatpush1.bf16.msra.mxu0 %v198
    %242 = vmatprep.subr.bf16.mxu0 0
    %243 = vmatpush1.bf16.msra.mxu0 %v199
    %244 = vmatprep.subr.bf16.mxu0 0
    %245 = vmatpush1.bf16.msra.mxu0 %v200
    %246 = vmatprep.subr.bf16.mxu0 0
    %247 = vmatpush1.bf16.msra.mxu0 %v201
    %248 = vmatprep.subr.bf16.mxu0 0
    %249 = vmatpush1.bf16.msra.mxu0 %v202
    %250 = vmatprep.subr.bf16.mxu0 0
    %251 = vmatpush1.bf16.msra.mxu0 %v203
    %252 = vmatprep.mubr.bf16.mxu0 %v121
    %253 = vmatmul.mubr.bf16.gmra.mrb[0].mxu0 %v120
    %v254 = vpop.f32.mrb[0].mxu0
    %v255 = vadd.f32 %v115, %v254
    %v256 = vpop.f32.mrb[0].mxu0
    %v257 = vpop.f32.mrb[0].mxu0
    %v258 = vpop.f32.mrb[0].mxu0
    %259 = vdwg.mxu0
    %v260 = vmax.f32 %v255, 0.0
    %v261 = vpack.c.bf16 %v260, %v260
    %v262 = vld [vmem:[#allocation7] sm:$0xf]
    %v263 = vld [vmem:[#allocation7 + $0x4] sm:$0xf]
    %v264 = vld [vmem:[#allocation7 + $0x8] sm:$0xf]
    %v265 = vld [vmem:[#allocation7 + $0xc] sm:$0xf]
    %v266 = vld [vmem:[#allocation7 + $0x10] sm:$0xf]
    %v267 = vld [vmem:[#allocation7 + $0x14] sm:$0xf]
    %v268 = vld [vmem:[#allocation7 + $0x18] sm:$0xf]
    %v269 = vld [vmem:[#allocation7 + $0x1c] sm:$0xf]
    %v270 = vld [vmem:[#allocation7 + $0x20] sm:$0xf]
    %v271 = vld [vmem:[#allocation7 + $0x24] sm:$0xf]
    %v272 = vld [vmem:[#allocation7 + $0x28] sm:$0xf]
    %v273 = vld [vmem:[#allocation7 + $0x2c] sm:$0xf]
    %v274 = vld [vmem:[#allocation7 + $0x30] sm:$0xf]
    %v275 = vld [vmem:[#allocation7 + $0x34] sm:$0xf]
    %v276 = vld [vmem:[#allocation7 + $0x38] sm:$0xf]
    %v277 = vld [vmem:[#allocation7 + $0x3c] sm:$0xf]
    %v279 = vlaneseq
    %v280 = vshrl.u32 %v279, 7
    %v281 = vsub.s32 0, %v280
    %v282 = vrot.slane %v76, %v281
    %v300 = vunpack.c.l.b16 %v262
    %v301 = vunpack.c.l.b16 %v263
    %v302 = vunpack.c.l.b16 %v264
    %v303 = vunpack.c.l.b16 %v265
    %v304 = vunpack.c.l.b16 %v266
    %v305 = vunpack.c.l.b16 %v267
    %v306 = vunpack.c.l.b16 %v268
    %v307 = vunpack.c.l.b16 %v269
    %v308 = vunpack.c.l.b16 %v270
    %v309 = vunpack.c.l.b16 %v271
    %v310 = vunpack.c.l.b16 %v272
    %v311 = vunpack.c.l.b16 %v273
    %v312 = vunpack.c.l.b16 %v274
    %v313 = vunpack.c.l.b16 %v275
    %v314 = vunpack.c.l.b16 %v276
    %v315 = vunpack.c.l.b16 %v277
    %v316 = vpack.c.b16 %v301, %v300
    %v317 = vpack.c.b16 %v303, %v302
    %v318 = vpack.c.b16 %v305, %v304
    %v319 = vpack.c.b16 %v307, %v306
    %v320 = vpack.c.b16 %v309, %v308
    %v321 = vpack.c.b16 %v311, %v310
    %v322 = vpack.c.b16 %v313, %v312
    %v323 = vpack.c.b16 %v315, %v314
    %332 = vmatprep.subr.bf16.mxu0 0
    %333 = vmatpush1.bf16.msra.mxu0 %v316
    %334 = vmatprep.subr.bf16.mxu0 0
    %335 = vmatpush1.bf16.msra.mxu0 %v317
    %336 = vmatprep.subr.bf16.mxu0 0
    %337 = vmatpush1.bf16.msra.mxu0 %v318
    %338 = vmatprep.subr.bf16.mxu0 0
    %339 = vmatpush1.bf16.msra.mxu0 %v319
    %340 = vmatprep.subr.bf16.mxu0 0
    %341 = vmatpush1.bf16.msra.mxu0 %v320
    %342 = vmatprep.subr.bf16.mxu0 0
    %343 = vmatpush1.bf16.msra.mxu0 %v321
    %344 = vmatprep.subr.bf16.mxu0 0
    %345 = vmatpush1.bf16.msra.mxu0 %v322
    %346 = vmatprep.subr.bf16.mxu0 0
    %347 = vmatpush1.bf16.msra.mxu0 %v323
    %348 = vmatprep.subr.bf16.mxu0 0
    %349 = vmatpush1.bf16.msra.mxu0 0
    %350 = vmatprep.subr.bf16.mxu0 0
    %351 = vmatpush1.bf16.msra.mxu0 0
    %352 = vmatprep.subr.bf16.mxu0 0
    %353 = vmatpush1.bf16.msra.mxu0 0
    %354 = vmatprep.subr.bf16.mxu0 0
    %355 = vmatpush1.bf16.msra.mxu0 0
    %356 = vmatprep.subr.bf16.mxu0 0
    %357 = vmatpush1.bf16.msra.mxu0 0
    %358 = vmatprep.subr.bf16.mxu0 0
    %359 = vmatpush1.bf16.msra.mxu0 0
    %360 = vmatprep.subr.bf16.mxu0 0
    %361 = vmatpush1.bf16.msra.mxu0 0
    %362 = vmatprep.subr.bf16.mxu0 0
    %363 = vmatpush1.bf16.msra.mxu0 0
    %364 = vmatprep.mubr.bf16.mxu0 0
    %365 = vmatmul.mubr.bf16.gmra.mrb[0].mxu0 %v261
    %v366 = vpop.f32.mrb[0].mxu0
    %v367 = vadd.f32 %v282, %v366
    %v368 = vpop.f32.mrb[0].mxu0
    %v369 = vpop.f32.mrb[0].mxu0
    %v370 = vpop.f32.mrb[0].mxu0
    %371 = vdwg.mxu0
    %v372 = vmax.f32 %v367, 0.0
    %v373 = vpack.c.bf16 %v372, %v372
    %v374 = vld [vmem:[#allocation8] sm:$0xf]
    %v375 = vld [vmem:[#allocation8 + $0x4] sm:$0xf]
    %v376 = vld [vmem:[#allocation8 + $0x8] sm:$0xf]
    %v377 = vld [vmem:[#allocation8 + $0xc] sm:$0xf]
    %v378 = vld [vmem:[#allocation8 + $0x10] sm:$0xf]
    %v379 = vld [vmem:[#allocation8 + $0x14] sm:$0xf]
    %v380 = vld [vmem:[#allocation8 + $0x18] sm:$0xf]
    %v381 = vld [vmem:[#allocation8 + $0x1c] sm:$0xf]
    %v382 = vld [vmem:[#allocation8 + $0x20] sm:$0xf]
    %v383 = vld [vmem:[#allocation8 + $0x24] sm:$0xf]
    %v384 = vld [vmem:[#allocation8 + $0x28] sm:$0xf]
    %v385 = vld [vmem:[#allocation8 + $0x2c] sm:$0xf]
    %v386 = vld [vmem:[#allocation8 + $0x30] sm:$0xf]
    %v387 = vld [vmem:[#allocation8 + $0x34] sm:$0xf]
    %v388 = vld [vmem:[#allocation8 + $0x38] sm:$0xf]
    %v389 = vld [vmem:[#allocation8 + $0x3c] sm:$0xf]
    %v391 = vlaneseq
    %v392 = vshrl.u32 %v391, 7
    %v393 = vsub.s32 0, %v392
    %v394 = vrot.slane %v77, %v393
    %v412 = vunpack.c.l.b16 %v374
    %v413 = vunpack.c.l.b16 %v375
    %v414 = vunpack.c.l.b16 %v376
    %v415 = vunpack.c.l.b16 %v377
    %v416 = vunpack.c.l.b16 %v378
    %v417 = vunpack.c.l.b16 %v379
    %v418 = vunpack.c.l.b16 %v380
    %v419 = vunpack.c.l.b16 %v381
    %v420 = vunpack.c.l.b16 %v382
    %v421 = vunpack.c.l.b16 %v383
    %v422 = vunpack.c.l.b16 %v384
    %v423 = vunpack.c.l.b16 %v385
    %v424 = vunpack.c.l.b16 %v386
    %v425 = vunpack.c.l.b16 %v387
    %v426 = vunpack.c.l.b16 %v388
    %v427 = vunpack.c.l.b16 %v389
    %v428 = vpack.c.b16 %v413, %v412
    %v429 = vpack.c.b16 %v415, %v414
    %v430 = vpack.c.b16 %v417, %v416
    %v431 = vpack.c.b16 %v419, %v418
    %v432 = vpack.c.b16 %v421, %v420
    %v433 = vpack.c.b16 %v423, %v422
    %v434 = vpack.c.b16 %v425, %v424
    %v435 = vpack.c.b16 %v427, %v426
    %444 = vmatprep.subr.bf16.mxu0 0
    %445 = vmatpush1.bf16.msra.mxu0 %v428
    %446 = vmatprep.subr.bf16.mxu0 0
    %447 = vmatpush1.bf16.msra.mxu0 %v429
    %448 = vmatprep.subr.bf16.mxu0 0
    %449 = vmatpush1.bf16.msra.mxu0 %v430
    %450 = vmatprep.subr.bf16.mxu0 0
    %451 = vmatpush1.bf16.msra.mxu0 %v431
    %452 = vmatprep.subr.bf16.mxu0 0
    %453 = vmatpush1.bf16.msra.mxu0 %v432
    %454 = vmatprep.subr.bf16.mxu0 0
    %455 = vmatpush1.bf16.msra.mxu0 %v433
    %456 = vmatprep.subr.bf16.mxu0 0
    %457 = vmatpush1.bf16.msra.mxu0 %v434
    %458 = vmatprep.subr.bf16.mxu0 0
    %459 = vmatpush1.bf16.msra.mxu0 %v435
    %460 = vmatprep.subr.bf16.mxu0 0
    %461 = vmatpush1.bf16.msra.mxu0 0
    %462 = vmatprep.subr.bf16.mxu0 0
    %463 = vmatpush1.bf16.msra.mxu0 0
    %464 = vmatprep.subr.bf16.mxu0 0
    %465 = vmatpush1.bf16.msra.mxu0 0
    %466 = vmatprep.subr.bf16.mxu0 0
    %467 = vmatpush1.bf16.msra.mxu0 0
    %468 = vmatprep.subr.bf16.mxu0 0
    %469 = vmatpush1.bf16.msra.mxu0 0
    %470 = vmatprep.subr.bf16.mxu0 0
    %471 = vmatpush1.bf16.msra.mxu0 0
    %472 = vmatprep.subr.bf16.mxu0 0
    %473 = vmatpush1.bf16.msra.mxu0 0
    %474 = vmatprep.subr.bf16.mxu0 0
    %475 = vmatpush1.bf16.msra.mxu0 0
    %476 = vmatprep.mubr.bf16.mxu0 0
    %477 = vmatmul.mubr.bf16.gmra.mrb[0].mxu0 %v373
    %v478 = vpop.f32.mrb[0].mxu0
    %v479 = vadd.f32 %v394, %v478
    %v480 = vpop.f32.mrb[0].mxu0
    %v481 = vpop.f32.mrb[0].mxu0
    %v482 = vpop.f32.mrb[0].mxu0
    %483 = vdwg.mxu0
    %484 = vst [vmem:[#allocation10] sm:$0xff] %v479
    // Predicated region
    $region38: #{tpu_custom_call.1} parent=1 // pred_check
      _
    $region39: #{tpu_custom_call.1} parent=1 // pred_check_branch
      %486 = sbr.rel (0) target = $region41
    $region40: #{tpu_custom_call.1} parent=1 // pred_region
      %s488 = ssub.s32 128, 128
      %489 = vsyncadd [#allocation4], %s488
      %s491 = sshll.u32 [#allocation10], 4
      %s492 = int_to_ptr.vmem [resolvable:$true] %s491
      %494 = dma.vmem_to_hbm [thread:$0]  %s492, 128, %s5, [#allocation4]
    $region41: #{tpu_custom_call.1} parent=1 // pred_fallthru
      _
    // Predicated region
    $region42: #{tpu_custom_call.1} parent=1 // pred_check
      _
    $region43: #{tpu_custom_call.1} parent=1 // pred_check_branch
      %496 = sbr.rel (0) target = $region45
    $region44: #{tpu_custom_call.1} parent=1 // pred_region
      %497 = dma.done [#allocation4], 128
    $region45: #{tpu_custom_call.1} parent=1 // pred_fallthru
      _
    %498 = vsyncpa [#allocation3], 1
    %499 = vsyncpa [#allocation6], 1
    %500 = vsyncpa [#allocation9], 1
    %501 = vsyncpa [#allocation4], 1

</llo_original>
